<compile_context>
chip_gen: v7x
topology: tpu7x:2x2x1
jax: 0.10.0
libtpu: 0.0.40
codegen_flags: <defaults>
</compile_context>

<pallas_src>
import jax
import jax.numpy as jnp
import numpy as np
from jax.experimental import pallas as pl
from jax.experimental.pallas import tpu as pltpu

NULL_LABEL = 0  # CharsetMapper.null_label (null char at index 0)


def _round_up(x, m):
    return (x + m - 1) // m * m


def _cdiv(a, b):
    return -(-a // b)


def alignment_kernel(l_ref, v_ref, wal_ref, wav_ref, ba_ref, wc_ref, bc_ref,
                     out_ref):
    """One row-tile of flattened (N*T, E) features per grid step.

    l_ref, v_ref : (Rb, E)   language / vision feature rows (compute dtype)
    wal_ref      : (E, E)    w_att weight rows for the l part (pre-transposed)
    wav_ref      : (E, E)    w_att weight rows for the v part (pre-transposed)
    ba_ref       : (1, E)    w_att bias
    wc_ref       : (E, Cp)   cls weight, pre-transposed, lane-padded
    bc_ref       : (1, Cp)   cls bias, lane-padded
    out_ref      : (Rb, Cp)  logits (lane-padded)
    """
    l = l_ref[...]
    v = v_ref[...]

    # w_att(concat(l, v)) == l @ W[:E] + v @ W[E:]   (concat order: (l, v))
    att = (jnp.dot(l, wal_ref[...], preferred_element_type=jnp.float32)
           + jnp.dot(v, wav_ref[...], preferred_element_type=jnp.float32)
           + ba_ref[...].astype(jnp.float32))

    # sigmoid(x) = 1 / (1 + exp(-x)): exp and the approximate reciprocal both
    # execute in the EUP slot, leaving the VALU free for the gating math.
    f_att = pl.reciprocal(1.0 + jnp.exp(-att), approx=True)

    # Gate in the matmul compute dtype (bf16 when the wrapper casts): the
    # gated result feeds a bf16 MXU matmul anyway, so an f32 detour buys
    # nothing and doubles the VALU/vreg work on v6e/v7x.
    gated = l + f_att.astype(l.dtype) * (v - l)    # == f_att*v + (1-f_att)*l

    logits = (jnp.dot(gated, wc_ref[...], preferred_element_type=jnp.float32)
              + bc_ref[...].astype(jnp.float32))
    out_ref[...] = logits.astype(out_ref.dtype)


def base_alignment(l_feature, v_feature, wa_t, ba, wc_t, bc, *,
                   compute_dtype=jnp.bfloat16,
                   logits_dtype=jnp.float32,
                   max_row_tile=512,
                   vmem_budget_bytes=24 << 20):
    """Pallas implementation of BaseAlignment.forward.

    wa_t : (2E, E)  w_att.weight pre-transposed (rows 0:E multiply l)
    ba   : (1, E)   w_att.bias
    wc_t : (E, C)   cls.weight pre-transposed
    bc   : (1, C)   cls.bias

    compute_dtype: dtype fed to the MXU (bf16 by default; f32 inputs are cast
    once here, accumulation stays f32).  logits_dtype: output store dtype
    (bf16 halves store bytes but may flip argmax near-ties in the decode).
    """
    N, T, E = l_feature.shape
    C = wc_t.shape[1]
    R = N * T

    cd = jnp.dtype(compute_dtype)
    cd_bytes = cd.itemsize
    out_bytes = jnp.dtype(logits_dtype).itemsize
    bias_bytes = jnp.dtype(ba.dtype).itemsize

    Cp = _round_up(C, 128)            # lane-dense logits store

    # --- Row tiling: balanced tiles (minimal padding), >= 2 grid steps when
    # there is enough work (both v7x TensorCores), VMEM guard for huge C. ---
    def vmem_need(row_tile):
        # Worst case: everything double-buffered (fallback path without the
        # single-buffered weight specs).
        return (2 * 2 * row_tile * E * cd_bytes            # l, v row tiles
                + 2 * row_tile * Cp * out_bytes             # logits tile
                + 2 * ((2 * E * E + E * Cp) * cd_bytes      # weights
                       + (E + Cp) * bias_bytes))            # biases

    num_tiles = max(1, _cdiv(R, max_row_tile))
    if num_tiles == 1 and R >= 512:
        num_tiles = 2                 # shard the parallel axis across 2 TCs
    while True:
        row_tile = _round_up(_cdiv(R, num_tiles), 8)
        if vmem_need(row_tile) <= vmem_budget_bytes or row_tile <= 8:
            break
        num_tiles += 1
    Rp = num_tiles * row_tile
    vmem_limit = int(min(max(vmem_need(row_tile) + (4 << 20), 16 << 20),
                         56 << 20))

    # --- Operand prep: cast ONCE outside the kernel. ---
    l2 = l_feature.reshape(R, E).astype(cd)
    v2 = v_feature.reshape(R, E).astype(cd)
    if Rp != R:
        pad = ((0, Rp - R), (0, 0))
        l2 = jnp.pad(l2, pad)
        v2 = jnp.pad(v2, pad)

    wa_l = wa_t[:E].astype(cd)        # (E, E)
    wa_v = wa_t[E:].astype(cd)        # (E, E)
    wc_p = (jnp.pad(wc_t, ((0, 0), (0, Cp - C))) if Cp != C else wc_t).astype(cd)
    bc_p = jnp.pad(bc, ((0, 0), (0, Cp - C))) if Cp != C else bc

    grid = (num_tiles,)

    cost = pl.CostEstimate(
        flops=int(2 * Rp * E * (2 * E + Cp) + 6 * Rp * E),
        transcendentals=int(2 * Rp * E),
        bytes_accessed=int((2 * Rp * E + 2 * E * E + E * Cp) * cd_bytes
                           + (E + Cp) * bias_bytes
                           + Rp * Cp * out_bytes),
    )

    def build(weight_pipeline_mode):
        def wspec(shape):
            if weight_pipeline_mode is None:
                return pl.BlockSpec(shape, lambda i: (0, 0))
            return pl.BlockSpec(shape, lambda i: (0, 0),
                                pipeline_mode=weight_pipeline_mode)

        return pl.pallas_call(
            alignment_kernel,
            out_shape=jax.ShapeDtypeStruct((Rp, Cp), logits_dtype),
            grid=grid,
            in_specs=[
                pl.BlockSpec((row_tile, E), lambda i: (i, 0)),   # l rows
                pl.BlockSpec((row_tile, E), lambda i: (i, 0)),   # v rows
                wspec((E, E)),                                   # w_att, l half
                wspec((E, E)),                                   # w_att, v half
                wspec((1, E)),                                   # w_att bias
                wspec((E, Cp)),                                  # cls weight
                wspec((1, Cp)),                                  # cls bias
            ],
            out_specs=pl.BlockSpec((row_tile, Cp), lambda i: (i, 0)),
            compiler_params=pltpu.CompilerParams(
                dimension_semantics=("parallel",),
                vmem_limit_bytes=vmem_limit),
            cost_estimate=cost,
        )

    args = (l2, v2, wa_l, wa_v, ba, wc_p, bc_p)
    try:
        # Grid-invariant weights: single VMEM buffer (constant index_map).
        logits_flat = build(pl.Buffered(1))(*args)
    except Exception:
        # Fallback for jax versions / lowering paths that reject the
        # single-buffer pipeline_mode; results are identical.
        logits_flat = build(None)(*args)

    logits = logits_flat[:R, :C].reshape(N, T, C)

    # Greedy length decode (Model._get_length) on the returned logits, in
    # plain JAX: first position whose argmax is the null label, +1; else T.
    pred = jnp.argmax(logits.astype(jnp.float32), axis=-1)   # (N, T)
    is_null = pred == NULL_LABEL
    abn = jnp.any(is_null, axis=-1)
    first = jnp.argmax(is_null, axis=-1)                     # first True idx
    pt_lengths = jnp.where(abn, first + 1, T).astype(jnp.int32)

    return {'logits': logits, 'pt_lengths': pt_lengths,
            'loss_weight': 1.0, 'name': 'alignment'}


def reference_logits(l, v, wa_t, ba, wc_t, bc):
    """Plain-JAX f32 mirror of the PyTorch forward (logits only)."""
    f = jnp.concatenate([l, v], axis=2)                       # (N, T, 2E)
    f_att = jax.nn.sigmoid(jnp.einsum('ntk,ke->nte', f, wa_t) + ba)
    out = f_att * v + (1.0 - f_att) * l
    return jnp.einsum('nte,ec->ntc', out, wc_t) + bc          # (N, T, C)


def reference_get_length(logits, null_label=NULL_LABEL):
    """Faithful port of Model._get_length (cumsum-based first-null decode)."""
    out = jnp.argmax(logits, axis=-1) == null_label           # (N, T)
    abn = jnp.any(out, axis=-1)
    first = jnp.argmax(((jnp.cumsum(out, axis=-1) == 1) & out).astype(jnp.int32),
                       axis=-1)
    return jnp.where(abn, first + 1, logits.shape[1]).astype(jnp.int32)


if __name__ == "__main__":
    # Small shapes consistent with the module's (N, T, E) convention.
    N, T, E, C = 2, 8, 32, 16        # batch, max_length, d_model, num_classes

    key = jax.random.PRNGKey(0)
    k1, k2, k3, k4, k5, k6 = jax.random.split(key, 6)

    l_feature = jax.random.normal(k1, (N, T, E), dtype=jnp.float32)
    v_feature = jax.random.normal(k2, (N, T, E), dtype=jnp.float32)

    # nn.Linear(2E, E) and nn.Linear(E, C), stored pre-transposed as
    # (in_features, out_features).
    wa_t = jax.random.normal(k3, (2 * E, E), dtype=jnp.float32) * 0.05
    ba = jax.random.normal(k4, (1, E), dtype=jnp.float32) * 0.05
    wc_t = jax.random.normal(k5, (E, C), dtype=jnp.float32) * 0.05
    bc = jax.random.normal(k6, (1, C), dtype=jnp.float32) * 0.05

    result = base_alignment(l_feature, v_feature, wa_t, ba, wc_t, bc)
    jax.block_until_ready(result['logits'])
    jax.block_until_ready(result['pt_lengths'])

    # Semantics check against the f32 module math.  Tolerance is loose
    # because the kernel feeds bf16 operands to the MXU (expected
    # quantization, not a bug).
    ref_logits = reference_logits(l_feature, v_feature, wa_t, ba, wc_t, bc)
    np.testing.assert_allclose(np.asarray(result['logits'], dtype=np.float32),
                               np.asarray(ref_logits), rtol=2e-2, atol=2e-2)

    # Length-decode check: the wrapper's first-null decode must match a
    # faithful port of the PyTorch cumsum-based decode on the same logits.
    ref_lens = reference_get_length(result['logits'].astype(jnp.float32))
    np.testing.assert_array_equal(np.asarray(result['pt_lengths']),
                                  np.asarray(ref_lens))

    print("KERNEL_OK")
</pallas_src>

<mosaic_0001>
module attributes {stable_mosaic.version = 11 : i64} {
  func.func @alignment_kernel(%arg0: i32, %arg1: memref<16x32xbf16, #tpu.memory_space<vmem>>, %arg2: memref<16x32xbf16, #tpu.memory_space<vmem>>, %arg3: memref<32x32xbf16, #tpu.memory_space<vmem>>, %arg4: memref<32x32xbf16, #tpu.memory_space<vmem>>, %arg5: memref<1x32xf32, #tpu.memory_space<vmem>>, %arg6: memref<32x128xbf16, #tpu.memory_space<vmem>>, %arg7: memref<1x128xf32, #tpu.memory_space<vmem>>, %arg8: memref<16x128xf32, #tpu.memory_space<vmem>>) attributes {dimension_semantics = [#tpu.dimension_semantics<parallel>], iteration_bounds = array<i64: 1>, scalar_prefetch = 0 : i64, scratch_operands = 0 : i64, tpu.core_type = #tpu.core_type<tc>, window_params = [{transform_indices = @transform_0, window_bounds = array<i64: 16, 32>}, {transform_indices = @transform_1, window_bounds = array<i64: 16, 32>}, {pipeline_mode = #tpu.pipeline_mode<synchronous>, transform_indices = @transform_2, window_bounds = array<i64: 32, 32>}, {pipeline_mode = #tpu.pipeline_mode<synchronous>, transform_indices = @transform_3, window_bounds = array<i64: 32, 32>}, {pipeline_mode = #tpu.pipeline_mode<synchronous>, transform_indices = @transform_4, window_bounds = array<i64: 1, 32>}, {pipeline_mode = #tpu.pipeline_mode<synchronous>, transform_indices = @transform_5, window_bounds = array<i64: 32, 128>}, {pipeline_mode = #tpu.pipeline_mode<synchronous>, transform_indices = @transform_6, window_bounds = array<i64: 1, 128>}, {transform_indices = @transform_7, window_bounds = array<i64: 16, 128>}]} {
    %c0 = arith.constant 0 : index
    %c0_0 = arith.constant 0 : index
    %0 = vector.load %arg1[%c0, %c0_0] : memref<16x32xbf16, #tpu.memory_space<vmem>>, vector<16x32xbf16>
    %c0_1 = arith.constant 0 : index
    %c0_2 = arith.constant 0 : index
    %1 = vector.load %arg2[%c0_1, %c0_2] : memref<16x32xbf16, #tpu.memory_space<vmem>>, vector<16x32xbf16>
    %c0_3 = arith.constant 0 : index
    %c0_4 = arith.constant 0 : index
    %2 = vector.load %arg3[%c0_3, %c0_4] : memref<32x32xbf16, #tpu.memory_space<vmem>>, vector<32x32xbf16>
    %cst = arith.constant dense<0.000000e+00> : vector<16x32xf32>
    %3 = tpu.matmul %0, %2, %cst {dimension_numbers = #tpu.dot_dimension_numbers<[1], [0], [0], [1], [0, 0, 1, 1], [], []>} : vector<16x32xbf16>, vector<32x32xbf16>, vector<16x32xf32> -> vector<16x32xf32>
    %c0_5 = arith.constant 0 : index
    %c0_6 = arith.constant 0 : index
    %4 = vector.load %arg4[%c0_5, %c0_6] : memref<32x32xbf16, #tpu.memory_space<vmem>>, vector<32x32xbf16>
    %cst_7 = arith.constant dense<0.000000e+00> : vector<16x32xf32>
    %5 = tpu.matmul %1, %4, %cst_7 {dimension_numbers = #tpu.dot_dimension_numbers<[1], [0], [0], [1], [0, 0, 1, 1], [], []>} : vector<16x32xbf16>, vector<32x32xbf16>, vector<16x32xf32> -> vector<16x32xf32>
    %6 = arith.addf %3, %5 : vector<16x32xf32>
    %c0_8 = arith.constant 0 : index
    %c0_9 = arith.constant 0 : index
    %7 = vector.load %arg5[%c0_8, %c0_9] : memref<1x32xf32, #tpu.memory_space<vmem>>, vector<1x32xf32>
    %8 = vector.broadcast %7 : vector<1x32xf32> to vector<16x32xf32>
    %9 = arith.addf %6, %8 : vector<16x32xf32>
    %cst_10 = arith.constant 0.000000e+00 : f32
    %10 = vector.broadcast %cst_10 : f32 to vector<16x32xf32>
    %11 = arith.subf %10, %9 : vector<16x32xf32>
    %12 = math.exp %11 : vector<16x32xf32>
    %cst_11 = arith.constant 1.000000e+00 : f32
    %13 = vector.broadcast %cst_11 : f32 to vector<16x32xf32>
    %14 = arith.addf %13, %12 : vector<16x32xf32>
    %15 = tpu.reciprocal %14 {approx = true} : vector<16x32xf32> -> vector<16x32xf32>
    %16 = arith.truncf %15 : vector<16x32xf32> to vector<16x32xbf16>
    %17 = arith.subf %1, %0 : vector<16x32xbf16>
    %18 = arith.mulf %16, %17 : vector<16x32xbf16>
    %19 = arith.addf %0, %18 : vector<16x32xbf16>
    %c0_12 = arith.constant 0 : index
    %c0_13 = arith.constant 0 : index
    %20 = vector.load %arg6[%c0_12, %c0_13] : memref<32x128xbf16, #tpu.memory_space<vmem>>, vector<32x128xbf16>
    %cst_14 = arith.constant dense<0.000000e+00> : vector<16x128xf32>
    %21 = tpu.matmul %19, %20, %cst_14 {dimension_numbers = #tpu.dot_dimension_numbers<[1], [0], [0], [1], [0, 0, 1, 1], [], []>} : vector<16x32xbf16>, vector<32x128xbf16>, vector<16x128xf32> -> vector<16x128xf32>
    %c0_15 = arith.constant 0 : index
    %c0_16 = arith.constant 0 : index
    %22 = vector.load %arg7[%c0_15, %c0_16] : memref<1x128xf32, #tpu.memory_space<vmem>>, vector<1x128xf32>
    %23 = vector.broadcast %22 : vector<1x128xf32> to vector<16x128xf32>
    %24 = arith.addf %21, %23 : vector<16x128xf32>
    %c0_17 = arith.constant 0 : index
    %c0_18 = arith.constant 0 : index
    %25 = vector.load %arg8[%c0_17, %c0_18] : memref<16x128xf32, #tpu.memory_space<vmem>>, vector<16x128xf32>
    tpu.vector_store %arg8[%c0_17, %c0_18], %24 {strides = array<i32>} : memref<16x128xf32, #tpu.memory_space<vmem>>, vector<16x128xf32>,
    return
  }
  func.func @transform_0(%arg0: i32) -> (i32, i32) {
    %c0_i32 = arith.constant 0 : i32
    %c0_i32_0 = arith.constant 0 : i32
    return %arg0, %c0_i32 : i32, i32
  }
  func.func @transform_1(%arg0: i32) -> (i32, i32) {
    %c0_i32 = arith.constant 0 : i32
    %c0_i32_0 = arith.constant 0 : i32
    return %arg0, %c0_i32 : i32, i32
  }
  func.func @transform_2(%arg0: i32) -> (i32, i32) {
    %c0_i32 = arith.constant 0 : i32
    %c0_i32_0 = arith.constant 0 : i32
    %c0_i32_1 = arith.constant 0 : i32
    return %c0_i32, %c0_i32_0 : i32, i32
  }
  func.func @transform_3(%arg0: i32) -> (i32, i32) {
    %c0_i32 = arith.constant 0 : i32
    %c0_i32_0 = arith.constant 0 : i32
    %c0_i32_1 = arith.constant 0 : i32
    return %c0_i32, %c0_i32_0 : i32, i32
  }
  func.func @transform_4(%arg0: i32) -> (i32, i32) {
    %c0_i32 = arith.constant 0 : i32
    %c0_i32_0 = arith.constant 0 : i32
    %c0_i32_1 = arith.constant 0 : i32
    return %c0_i32, %c0_i32_0 : i32, i32
  }
  func.func @transform_5(%arg0: i32) -> (i32, i32) {
    %c0_i32 = arith.constant 0 : i32
    %c0_i32_0 = arith.constant 0 : i32
    %c0_i32_1 = arith.constant 0 : i32
    return %c0_i32, %c0_i32_0 : i32, i32
  }
  func.func @transform_6(%arg0: i32) -> (i32, i32) {
    %c0_i32 = arith.constant 0 : i32
    %c0_i32_0 = arith.constant 0 : i32
    %c0_i32_1 = arith.constant 0 : i32
    return %c0_i32, %c0_i32_0 : i32, i32
  }
  func.func @transform_7(%arg0: i32) -> (i32, i32) {
    %c0_i32 = arith.constant 0 : i32
    %c0_i32_0 = arith.constant 0 : i32
    return %arg0, %c0_i32 : i32, i32
  }
}

module attributes {stable_mosaic.version = 11 : i64} {
  func.func @alignment_kernel(%arg0: i32, %arg1: memref<16x32xbf16, #tpu.memory_space<vmem>>, %arg2: memref<16x32xbf16, #tpu.memory_space<vmem>>, %arg3: memref<32x32xbf16, #tpu.memory_space<vmem>>, %arg4: memref<32x32xbf16, #tpu.memory_space<vmem>>, %arg5: memref<1x32xf32, #tpu.memory_space<vmem>>, %arg6: memref<32x128xbf16, #tpu.memory_space<vmem>>, %arg7: memref<1x128xf32, #tpu.memory_space<vmem>>, %arg8: memref<16x128xf32, #tpu.memory_space<vmem>>) attributes {dimension_semantics = [#tpu.dimension_semantics<parallel>], iteration_bounds = array<i64: 1>, scalar_prefetch = 0 : i64, scratch_operands = 0 : i64, tpu.core_type = #tpu.core_type<tc>, window_params = [{transform_indices = @transform_0, window_bounds = array<i64: 16, 32>}, {transform_indices = @transform_1, window_bounds = array<i64: 16, 32>}, {pipeline_mode = #tpu.pipeline_mode<synchronous>, transform_indices = @transform_2, window_bounds = array<i64: 32, 32>}, {pipeline_mode = #tpu.pipeline_mode<synchronous>, transform_indices = @transform_3, window_bounds = array<i64: 32, 32>}, {pipeline_mode = #tpu.pipeline_mode<synchronous>, transform_indices = @transform_4, window_bounds = array<i64: 1, 32>}, {pipeline_mode = #tpu.pipeline_mode<synchronous>, transform_indices = @transform_5, window_bounds = array<i64: 32, 128>}, {pipeline_mode = #tpu.pipeline_mode<synchronous>, transform_indices = @transform_6, window_bounds = array<i64: 1, 128>}, {transform_indices = @transform_7, window_bounds = array<i64: 16, 128>}]} {
    %c0 = arith.constant 0 : index
    %c0_0 = arith.constant 0 : index
    %0 = vector.load %arg1[%c0, %c0_0] : memref<16x32xbf16, #tpu.memory_space<vmem>>, vector<16x32xbf16>
    %c0_1 = arith.constant 0 : index
    %c0_2 = arith.constant 0 : index
    %1 = vector.load %arg2[%c0_1, %c0_2] : memref<16x32xbf16, #tpu.memory_space<vmem>>, vector<16x32xbf16>
    %c0_3 = arith.constant 0 : index
    %c0_4 = arith.constant 0 : index
    %2 = vector.load %arg3[%c0_3, %c0_4] : memref<32x32xbf16, #tpu.memory_space<vmem>>, vector<32x32xbf16>
    %cst = arith.constant dense<0.000000e+00> : vector<16x32xf32>
    %3 = tpu.matmul %0, %2, %cst {dimension_numbers = #tpu.dot_dimension_numbers<[1], [0], [0], [1], [0, 0, 1, 1], [], []>} : vector<16x32xbf16>, vector<32x32xbf16>, vector<16x32xf32> -> vector<16x32xf32>
    %c0_5 = arith.constant 0 : index
    %c0_6 = arith.constant 0 : index
    %4 = vector.load %arg4[%c0_5, %c0_6] : memref<32x32xbf16, #tpu.memory_space<vmem>>, vector<32x32xbf16>
    %cst_7 = arith.constant dense<0.000000e+00> : vector<16x32xf32>
    %5 = tpu.matmul %1, %4, %cst_7 {dimension_numbers = #tpu.dot_dimension_numbers<[1], [0], [0], [1], [0, 0, 1, 1], [], []>} : vector<16x32xbf16>, vector<32x32xbf16>, vector<16x32xf32> -> vector<16x32xf32>
    %6 = arith.addf %3, %5 : vector<16x32xf32>
    %c0_8 = arith.constant 0 : index
    %c0_9 = arith.constant 0 : index
    %7 = vector.load %arg5[%c0_8, %c0_9] : memref<1x32xf32, #tpu.memory_space<vmem>>, vector<1x32xf32>
    %8 = vector.broadcast %7 : vector<1x32xf32> to vector<16x32xf32>
    %9 = arith.addf %6, %8 : vector<16x32xf32>
    %cst_10 = arith.constant 0.000000e+00 : f32
    %10 = vector.broadcast %cst_10 : f32 to vector<16x32xf32>
    %11 = arith.subf %10, %9 : vector<16x32xf32>
    %12 = math.exp %11 : vector<16x32xf32>
    %cst_11 = arith.constant 1.000000e+00 : f32
    %13 = vector.broadcast %cst_11 : f32 to vector<16x32xf32>
    %14 = arith.addf %13, %12 : vector<16x32xf32>
    %15 = tpu.reciprocal %14 {approx = true} : vector<16x32xf32> -> vector<16x32xf32>
    %16 = arith.truncf %15 : vector<16x32xf32> to vector<16x32xbf16>
    %17 = arith.subf %1, %0 : vector<16x32xbf16>
    %18 = arith.mulf %16, %17 : vector<16x32xbf16>
    %19 = arith.addf %0, %18 : vector<16x32xbf16>
    %c0_12 = arith.constant 0 : index
    %c0_13 = arith.constant 0 : index
    %20 = vector.load %arg6[%c0_12, %c0_13] : memref<32x128xbf16, #tpu.memory_space<vmem>>, vector<32x128xbf16>
    %cst_14 = arith.constant dense<0.000000e+00> : vector<16x128xf32>
    %21 = tpu.matmul %19, %20, %cst_14 {dimension_numbers = #tpu.dot_dimension_numbers<[1], [0], [0], [1], [0, 0, 1, 1], [], []>} : vector<16x32xbf16>, vector<32x128xbf16>, vector<16x128xf32> -> vector<16x128xf32>
    %c0_15 = arith.constant 0 : index
    %c0_16 = arith.constant 0 : index
    %22 = vector.load %arg7[%c0_15, %c0_16] : memref<1x128xf32, #tpu.memory_space<vmem>>, vector<1x128xf32>
    %23 = vector.broadcast %22 : vector<1x128xf32> to vector<16x128xf32>
    %24 = arith.addf %21, %23 : vector<16x128xf32>
    %c0_17 = arith.constant 0 : index
    %c0_18 = arith.constant 0 : index
    %25 = vector.load %arg8[%c0_17, %c0_18] : memref<16x128xf32, #tpu.memory_space<vmem>>, vector<16x128xf32>
    tpu.vector_store %arg8[%c0_17, %c0_18], %24 {strides = array<i32>} : memref<16x128xf32, #tpu.memory_space<vmem>>, vector<16x128xf32>,
    return
  }
  func.func @transform_0(%arg0: i32) -> (i32, i32) {
    %c0_i32 = arith.constant 0 : i32
    %c0_i32_0 = arith.constant 0 : i32
    return %arg0, %c0_i32 : i32, i32
  }
  func.func @transform_1(%arg0: i32) -> (i32, i32) {
    %c0_i32 = arith.constant 0 : i32
    %c0_i32_0 = arith.constant 0 : i32
    return %arg0, %c0_i32 : i32, i32
  }
  func.func @transform_2(%arg0: i32) -> (i32, i32) {
    %c0_i32 = arith.constant 0 : i32
    %c0_i32_0 = arith.constant 0 : i32
    %c0_i32_1 = arith.constant 0 : i32
    return %c0_i32, %c0_i32_0 : i32, i32
  }
  func.func @transform_3(%arg0: i32) -> (i32, i32) {
    %c0_i32 = arith.constant 0 : i32
    %c0_i32_0 = arith.constant 0 : i32
    %c0_i32_1 = arith.constant 0 : i32
    return %c0_i32, %c0_i32_0 : i32, i32
  }
  func.func @transform_4(%arg0: i32) -> (i32, i32) {
    %c0_i32 = arith.constant 0 : i32
    %c0_i32_0 = arith.constant 0 : i32
    %c0_i32_1 = arith.constant 0 : i32
    return %c0_i32, %c0_i32_0 : i32, i32
  }
  func.func @transform_5(%arg0: i32) -> (i32, i32) {
    %c0_i32 = arith.constant 0 : i32
    %c0_i32_0 = arith.constant 0 : i32
    %c0_i32_1 = arith.constant 0 : i32
    return %c0_i32, %c0_i32_0 : i32, i32
  }
  func.func @transform_6(%arg0: i32) -> (i32, i32) {
    %c0_i32 = arith.constant 0 : i32
    %c0_i32_0 = arith.constant 0 : i32
    %c0_i32_1 = arith.constant 0 : i32
    return %c0_i32, %c0_i32_0 : i32, i32
  }
  func.func @transform_7(%arg0: i32) -> (i32, i32) {
    %c0_i32 = arith.constant 0 : i32
    %c0_i32_0 = arith.constant 0 : i32
    return %arg0, %c0_i32 : i32, i32
  }
}

</mosaic_0001>

<llo_original>
// kernel: tpu_custom_call.1
$region0: #{tpu_custom_call.1}
  #allocation0 [shape = 'u32[]', space=smem, size = 0x4, offset = 0x4, fixed_abs, tag = 'smem constant byte address 0x4 - core index']
  #allocation1 [shape = 'u32[144,128]{1,0:T(1,128)}', space=vmem, size = 0x12000, scoped, tag = 'internal scratch']
  %s0 = inlined_call_operand.hbm [shape: bf16[16,32], index: 0, kind: input, shape index: {}]
  %s1 = inlined_call_operand.hbm [shape: bf16[16,32], index: 1, kind: input, shape index: {}]
  %s2 = inlined_call_operand.hbm [shape: bf16[32,32], index: 2, kind: input, shape index: {}]
  %s3 = inlined_call_operand.hbm [shape: bf16[32,32], index: 3, kind: input, shape index: {}]
  %s4 = inlined_call_operand.vmem [shape: f32[1,32], index: 4, kind: input, shape index: {}]
  %s5 = inlined_call_operand.vmem [shape: bf16[32,128], index: 5, kind: input, shape index: {}]
  %s6 = inlined_call_operand.vmem [shape: f32[1,128], index: 6, kind: input, shape index: {}]
  %s7 = inlined_call_operand.hbm [shape: f32[16,128], index: 7, kind: output, shape index: {}]
  %s8 = sld [smem:[#allocation0]]
  $region54: #{tpu_custom_call.1} parent=0
    _
  %s10 = ssub.s32 1, %s8
  %s11 = scalar_select 0, %s10, %s8
  $region1: #{tpu_custom_call.1} parent=0
    #allocation2 [shape = 'u8[4096]{0}', space=vmem, size = 0x1000, scoped, tag = 'input window, operand 0, single buffered']
    #allocation3 [shape = 's32[1]{0}', space=sflag, size = 0x4, scoped, tag = 'scoped memory for tpu_custom_call.1']
    #allocation4 [shape = 's32[1]{0}', space=sflag, size = 0x4, scoped, tag = 'scoped memory for tpu_custom_call.1']
    #allocation5 [shape = 'u8[4096]{0}', space=vmem, size = 0x1000, scoped, tag = 'input window, operand 1, single buffered']
    #allocation6 [shape = 's32[1]{0}', space=sflag, size = 0x4, scoped, tag = 'scoped memory for tpu_custom_call.1']
    #allocation7 [shape = 'u8[8192]{0}', space=vmem, size = 0x2000, scoped, tag = 'input window, operand 2, single buffered']
    #allocation8 [shape = 'u8[8192]{0}', space=vmem, size = 0x2000, scoped, tag = 'input window, operand 3, single buffered']
    #allocation9 [shape = 's32[1]{0}', space=sflag, size = 0x4, scoped, tag = 'scoped memory for tpu_custom_call.1']
    #allocation10 [shape = 'u8[8192]{0}', space=vmem, size = 0x2000, scoped, tag = 'output window, operand 0, single buffered']
    %12 = vsyncpa [#allocation3], 0
    %13 = vsyncpa [#allocation6], 0
    %14 = vsyncpa [#allocation9], 0
    %15 = vsyncpa [#allocation4], 0
    // Predicated region
    $region2: #{tpu_custom_call.1} parent=1 // pred_check
      _
    $region3: #{tpu_custom_call.1} parent=1 // pred_check_branch
      %17 = sbr.rel (0) target = $region5
    $region4: #{tpu_custom_call.1} parent=1 // pred_region
      %s19 = ssub.s32 128, 128
      %20 = vsyncadd [#allocation3], %s19
      %s21 = sshll.u32 [#allocation2], 4
      %s22 = int_to_ptr.vmem [resolvable:$true] %s21
      %27 = dma.hbm_to_vmem [thread:$0]  %s0, 128, %s22, [#allocation3], 64, 64, 4
    $region5: #{tpu_custom_call.1} parent=1 // pred_fallthru
      _
    // Predicated region
    $region6: #{tpu_custom_call.1} parent=1 // pred_check
      _
    $region7: #{tpu_custom_call.1} parent=1 // pred_check_branch
      %29 = sbr.rel (0) target = $region9
    $region8: #{tpu_custom_call.1} parent=1 // pred_region
      %s31 = ssub.s32 128, 128
      %32 = vsyncadd [#allocation6], %s31
      %s33 = sshll.u32 [#allocation5], 4
      %s34 = int_to_ptr.vmem [resolvable:$true] %s33
      %39 = dma.hbm_to_vmem [thread:$0]  %s1, 128, %s34, [#allocation6], 64, 64, 4
    $region9: #{tpu_custom_call.1} parent=1 // pred_fallthru
      _
    // Predicated region
    $region10: #{tpu_custom_call.1} parent=1 // pred_check
      _
    $region11: #{tpu_custom_call.1} parent=1 // pred_check_branch
      %41 = sbr.rel (0) target = $region13
    $region12: #{tpu_custom_call.1} parent=1 // pred_region
      %s43 = ssub.s32 256, 256
      %44 = vsyncadd [#allocation6], %s43
      %s45 = sshll.u32 [#allocation7], 4
      %s46 = int_to_ptr.vmem [resolvable:$true] %s45
      %51 = dma.hbm_to_vmem [thread:$0]  %s2, 256, %s46, [#allocation6], 64, 64, 4
    $region13: #{tpu_custom_call.1} parent=1 // pred_fallthru
      _
    // Predicated region
    $region14: #{tpu_custom_call.1} parent=1 // pred_check
      _
    $region15: #{tpu_custom_call.1} parent=1 // pred_check_branch
      %53 = sbr.rel (0) target = $region17
    $region16: #{tpu_custom_call.1} parent=1 // pred_region
      %s55 = ssub.s32 256, 256
      %56 = vsyncadd [#allocation9], %s55
      %s57 = sshll.u32 [#allocation8], 4
      %s58 = int_to_ptr.vmem [resolvable:$true] %s57
      %63 = dma.hbm_to_vmem [thread:$0]  %s3, 256, %s58, [#allocation9], 64, 64, 4
    $region17: #{tpu_custom_call.1} parent=1 // pred_fallthru
      _
    // Predicated region
    $region18: #{tpu_custom_call.1} parent=1 // pred_check
      _
    $region19: #{tpu_custom_call.1} parent=1 // pred_check_branch
      %65 = sbr.rel (0) target = $region21
    $region20: #{tpu_custom_call.1} parent=1 // pred_region
      _
    $region21: #{tpu_custom_call.1} parent=1 // pred_fallthru
      _
    // Predicated region
    $region22: #{tpu_custom_call.1} parent=1 // pred_check
      _
    $region23: #{tpu_custom_call.1} parent=1 // pred_check_branch
      %67 = sbr.rel (0) target = $region25
    $region24: #{tpu_custom_call.1} parent=1 // pred_region
      _
    $region25: #{tpu_custom_call.1} parent=1 // pred_fallthru
      _
    // Predicated region
    $region26: #{tpu_custom_call.1} parent=1 // pred_check
      _
    $region27: #{tpu_custom_call.1} parent=1 // pred_check_branch
      %69 = sbr.rel (0) target = $region29
    $region28: #{tpu_custom_call.1} parent=1 // pred_region
      _
    $region29: #{tpu_custom_call.1} parent=1 // pred_fallthru
      _
    // Predicated region
    $region30: #{tpu_custom_call.1} parent=1 // pred_check
      _
    $region31: #{tpu_custom_call.1} parent=1 // pred_check_branch
      %71 = sbr.rel (0) target = $region33
    $region32: #{tpu_custom_call.1} parent=1 // pred_region
      %72 = dma.done [#allocation3], 128
    $region33: #{tpu_custom_call.1} parent=1 // pred_fallthru
      _
    // Predicated region
    $region34: #{tpu_custom_call.1} parent=1 // pred_check
      _
    $region35: #{tpu_custom_call.1} parent=1 // pred_check_branch
      %74 = sbr.rel (0) target = $region37
    $region36: #{tpu_custom_call.1} parent=1 // pred_region
      %75 = dma.done [#allocation6], 128
    $region37: #{tpu_custom_call.1} parent=1 // pred_fallthru
      _
    // Predicated region
    $region38: #{tpu_custom_call.1} parent=1 // pred_check
      _
    $region39: #{tpu_custom_call.1} parent=1 // pred_check_branch
      %77 = sbr.rel (0) target = $region41
    $region40: #{tpu_custom_call.1} parent=1 // pred_region
      %78 = dma.done [#allocation6], 256
    $region41: #{tpu_custom_call.1} parent=1 // pred_fallthru
      _
    // Predicated region
    $region42: #{tpu_custom_call.1} parent=1 // pred_check
      _
    $region43: #{tpu_custom_call.1} parent=1 // pred_check_branch
      %80 = sbr.rel (0) target = $region45
    $region44: #{tpu_custom_call.1} parent=1 // pred_region
      %81 = dma.done [#allocation9], 256
    $region45: #{tpu_custom_call.1} parent=1 // pred_fallthru
      _
    %v83 = vld [vmem:[#allocation2] sm:$0xf]
    %v84 = vld [vmem:[#allocation2 + $0x4] sm:$0xf]
    %v85 = vld [vmem:[#allocation5] sm:$0xf]
    %v86 = vld [vmem:[#allocation5 + $0x4] sm:$0xf]
    %v87 = vld [vmem:[#allocation7] sm:$0xf]
    %v88 = vld [vmem:[#allocation7 + $0x4] sm:$0xf]
    %v89 = vld [vmem:[#allocation7 + $0x8] sm:$0xf]
    %v90 = vld [vmem:[#allocation7 + $0xc] sm:$0xf]
    %v91 = vld [vmem:[#allocation8] sm:$0xf]
    %v92 = vld [vmem:[#allocation8 + $0x4] sm:$0xf]
    %v93 = vld [vmem:[#allocation8 + $0x8] sm:$0xf]
    %v94 = vld [vmem:[#allocation8 + $0xc] sm:$0xf]
    %v97 = vunpack.c.l.b16 %v85
    %v98 = vunpack.c.l.b16 %v86
    %v99 = vpack.c.b16 %v98, %v97
    %v104 = vunpack.c.l.b16 %v91
    %v105 = vunpack.c.l.b16 %v92
    %v106 = vunpack.c.l.b16 %v93
    %v107 = vunpack.c.l.b16 %v94
    %v108 = vpack.c.b16 %v105, %v104
    %v109 = vpack.c.b16 %v107, %v106
    %vm112 = vcmask 261120
    %v114 = vsel %vm112, %v99, 0
    %116 = vmatprep.subr.bf16.mxu0 0
    %117 = vmatpush1.bf16.msra.mxu0 %v108
    %118 = vmatprep.subr.bf16.mxu0 0
    %119 = vmatpush1.bf16.msra.mxu0 %v109
    %120 = vmatprep.subr.bf16.mxu0 0
    %121 = vmatpush1.bf16.msra.mxu0 0
    %122 = vmatprep.subr.bf16.mxu0 0
    %123 = vmatpush1.bf16.msra.mxu0 0
    %124 = vmatprep.subr.bf16.mxu0 0
    %125 = vmatpush1.bf16.msra.mxu0 0
    %126 = vmatprep.subr.bf16.mxu0 0
    %127 = vmatpush1.bf16.msra.mxu0 0
    %128 = vmatprep.subr.bf16.mxu0 0
    %129 = vmatpush1.bf16.msra.mxu0 0
    %130 = vmatprep.subr.bf16.mxu0 0
    %131 = vmatpush1.bf16.msra.mxu0 0
    %132 = vmatprep.subr.bf16.mxu0 0
    %133 = vmatpush1.bf16.msra.mxu0 0
    %134 = vmatprep.subr.bf16.mxu0 0
    %135 = vmatpush1.bf16.msra.mxu0 0
    %136 = vmatprep.subr.bf16.mxu0 0
    %137 = vmatpush1.bf16.msra.mxu0 0
    %138 = vmatprep.subr.bf16.mxu0 0
    %139 = vmatpush1.bf16.msra.mxu0 0
    %140 = vmatprep.subr.bf16.mxu0 0
    %141 = vmatpush1.bf16.msra.mxu0 0
    %142 = vmatprep.subr.bf16.mxu0 0
    %143 = vmatpush1.bf16.msra.mxu0 0
    %144 = vmatprep.subr.bf16.mxu0 0
    %145 = vmatpush1.bf16.msra.mxu0 0
    %146 = vmatprep.subr.bf16.mxu0 0
    %147 = vmatpush1.bf16.msra.mxu0 0
    %148 = vmatprep.mubr.bf16.mxu0 0
    %149 = vmatmul.mubr.bf16.gmra.mrb[0].mxu0 %v114
    %v150 = vpop.f32.mrb[0].mxu0
    %v151 = vadd.f32 0.0, %v150
    %v152 = vpop.f32.mrb[0].mxu0
    %v153 = vpop.f32.mrb[0].mxu0
    %v154 = vadd.f32 0.0, %v153
    %v155 = vpop.f32.mrb[0].mxu0
    %156 = vdwg.mxu0
    %v159 = vunpack.c.l.b16 %v83
    %v160 = vunpack.c.l.b16 %v84
    %v161 = vpack.c.b16 %v160, %v159
    %v166 = vunpack.c.l.b16 %v87
    %v167 = vunpack.c.l.b16 %v88
    %v168 = vunpack.c.l.b16 %v89
    %v169 = vunpack.c.l.b16 %v90
    %v170 = vpack.c.b16 %v167, %v166
    %v171 = vpack.c.b16 %v169, %v168
    %v175 = vsel %vm112, %v161, 0
    %177 = vmatprep.subr.bf16.mxu0 0
    %178 = vmatpush1.bf16.msra.mxu0 %v170
    %179 = vmatprep.subr.bf16.mxu0 0
    %180 = vmatpush1.bf16.msra.mxu0 %v171
    %181 = vmatprep.subr.bf16.mxu0 0
    %182 = vmatpush1.bf16.msra.mxu0 0
    %183 = vmatprep.subr.bf16.mxu0 0
    %184 = vmatpush1.bf16.msra.mxu0 0
    %185 = vmatprep.subr.bf16.mxu0 0
    %186 = vmatpush1.bf16.msra.mxu0 0
    %187 = vmatprep.subr.bf16.mxu0 0
    %188 = vmatpush1.bf16.msra.mxu0 0
    %189 = vmatprep.subr.bf16.mxu0 0
    %190 = vmatpush1.bf16.msra.mxu0 0
    %191 = vmatprep.subr.bf16.mxu0 0
    %192 = vmatpush1.bf16.msra.mxu0 0
    %193 = vmatprep.subr.bf16.mxu0 0
    %194 = vmatpush1.bf16.msra.mxu0 0
    %195 = vmatprep.subr.bf16.mxu0 0
    %196 = vmatpush1.bf16.msra.mxu0 0
    %197 = vmatprep.subr.bf16.mxu0 0
    %198 = vmatpush1.bf16.msra.mxu0 0
    %199 = vmatprep.subr.bf16.mxu0 0
    %200 = vmatpush1.bf16.msra.mxu0 0
    %201 = vmatprep.subr.bf16.mxu0 0
    %202 = vmatpush1.bf16.msra.mxu0 0
    %203 = vmatprep.subr.bf16.mxu0 0
    %204 = vmatpush1.bf16.msra.mxu0 0
    %205 = vmatprep.subr.bf16.mxu0 0
    %206 = vmatpush1.bf16.msra.mxu0 0
    %207 = vmatprep.subr.bf16.mxu0 0
    %208 = vmatpush1.bf16.msra.mxu0 0
    %209 = vmatprep.mubr.bf16.mxu0 0
    %210 = vmatmul.mubr.bf16.gmra.mrb[0].mxu0 %v175
    %v211 = vpop.f32.mrb[0].mxu0
    %v212 = vadd.f32 %v151, %v211
    %v213 = vpop.f32.mrb[0].mxu0
    %v214 = vpop.f32.mrb[0].mxu0
    %v215 = vadd.f32 %v154, %v214
    %v216 = vpop.f32.mrb[0].mxu0
    %217 = vdwg.mxu0
    %v218 = vld [vmem:[%s4] sm:$0x1]
    %v220 = vlaneseq
    %v221 = vshrl.u32 %v220, 7
    %v222 = vsub.s32 0, %v221
    %v223 = vrot.slane %v218, %v222
    %v225 = vadd.f32 %v212, %v223
    %v226 = vadd.f32 %v215, %v223
    %v227 = vsub.f32 0.0, %v225
    %v228 = vsub.f32 0.0, %v226
    %v229 = vmul.f32 %v227, 1.442695
    %v230 = vpow.pop %v229
    %v231 = vmul.f32 %v228, 1.442695
    %v232 = vpow.pop %v231
    %v233 = vadd.f32 %v230, 1.0
    %v234 = vadd.f32 %v232, 1.0
    %v235 = vrcp.pop %v233
    %v236 = vrcp.pop %v234
    %v237 = vpack.c.bf16 %v236, %v235
    %v238 = vsub.bf16 %v85, %v83
    %v239 = vsub.bf16 %v86, %v84
    %v242 = vunpack.c.l.b16 %v238
    %v243 = vunpack.c.l.b16 %v239
    %v244 = vpack.c.b16 %v243, %v242
    %v246 = vmul.bf16 %v237, %v244
    %v248 = vunpack.c.l.b16 %v246
    %v249 = vunpack.c.h.b16 %v246
    %v250 = vpack.c.b16 %v248, %v248
    %v251 = vpack.c.b16 %v249, %v249
    %v254 = vadd.bf16 %v83, %v250
    %v255 = vadd.bf16 %v84, %v251
    %v256 = vld [vmem:[%s5] sm:$0xf]
    %v257 = vld [vmem:[%s5 + $0x4] sm:$0xf]
    %v258 = vld [vmem:[%s5 + $0x8] sm:$0xf]
    %v259 = vld [vmem:[%s5 + $0xc] sm:$0xf]
    %v260 = vld [vmem:[%s6] sm:$0x1]
    %v262 = vlaneseq
    %v263 = vshrl.u32 %v262, 7
    %v264 = vsub.s32 0, %v263
    %v265 = vrot.slane %v260, %v264
    %v269 = vunpack.c.l.b16 %v254
    %v270 = vunpack.c.l.b16 %v255
    %v271 = vpack.c.b16 %v270, %v269
    %v276 = vunpack.c.l.b16 %v256
    %v277 = vunpack.c.l.b16 %v257
    %v278 = vunpack.c.l.b16 %v258
    %v279 = vunpack.c.l.b16 %v259
    %v280 = vpack.c.b16 %v277, %v276
    %v281 = vpack.c.b16 %v279, %v278
    %v285 = vsel %vm112, %v271, 0
    %287 = vmatprep.subr.bf16.mxu0 0
    %288 = vmatpush1.bf16.msra.mxu0 %v280
    %289 = vmatprep.subr.bf16.mxu0 0
    %290 = vmatpush1.bf16.msra.mxu0 %v281
    %291 = vmatprep.subr.bf16.mxu0 0
    %292 = vmatpush1.bf16.msra.mxu0 0
    %293 = vmatprep.subr.bf16.mxu0 0
    %294 = vmatpush1.bf16.msra.mxu0 0
    %295 = vmatprep.subr.bf16.mxu0 0
    %296 = vmatpush1.bf16.msra.mxu0 0
    %297 = vmatprep.subr.bf16.mxu0 0
    %298 = vmatpush1.bf16.msra.mxu0 0
    %299 = vmatprep.subr.bf16.mxu0 0
    %300 = vmatpush1.bf16.msra.mxu0 0
    %301 = vmatprep.subr.bf16.mxu0 0
    %302 = vmatpush1.bf16.msra.mxu0 0
    %303 = vmatprep.subr.bf16.mxu0 0
    %304 = vmatpush1.bf16.msra.mxu0 0
    %305 = vmatprep.subr.bf16.mxu0 0
    %306 = vmatpush1.bf16.msra.mxu0 0
    %307 = vmatprep.subr.bf16.mxu0 0
    %308 = vmatpush1.bf16.msra.mxu0 0
    %309 = vmatprep.subr.bf16.mxu0 0
    %310 = vmatpush1.bf16.msra.mxu0 0
    %311 = vmatprep.subr.bf16.mxu0 0
    %312 = vmatpush1.bf16.msra.mxu0 0
    %313 = vmatprep.subr.bf16.mxu0 0
    %314 = vmatpush1.bf16.msra.mxu0 0
    %315 = vmatprep.subr.bf16.mxu0 0
    %316 = vmatpush1.bf16.msra.mxu0 0
    %317 = vmatprep.subr.bf16.mxu0 0
    %318 = vmatpush1.bf16.msra.mxu0 0
    %319 = vmatprep.mubr.bf16.mxu0 0
    %320 = vmatmul.mubr.bf16.gmra.mrb[0].mxu0 %v285
    %v321 = vpop.f32.mrb[0].mxu0
    %v322 = vadd.f32 %v265, %v321
    %v323 = vpop.f32.mrb[0].mxu0
    %v324 = vpop.f32.mrb[0].mxu0
    %v325 = vadd.f32 %v265, %v324
    %v326 = vpop.f32.mrb[0].mxu0
    %327 = vdwg.mxu0
    %328 = vst [vmem:[#allocation10] sm:$0xff] %v322
    %329 = vst [vmem:[#allocation10 + $0x8] sm:$0xff] %v325
    // Predicated region
    $region46: #{tpu_custom_call.1} parent=1 // pred_check
      _
    $region47: #{tpu_custom_call.1} parent=1 // pred_check_branch
      %331 = sbr.rel (0) target = $region49
    $region48: #{tpu_custom_call.1} parent=1 // pred_region
      %s333 = ssub.s32 256, 256
      %334 = vsyncadd [#allocation4], %s333
      %s335 = sshll.u32 [#allocation10], 4
      %s336 = int_to_ptr.vmem [resolvable:$true] %s335
      %341 = dma.vmem_to_hbm [thread:$0]  %s336, 256, %s7, [#allocation4], 128, 128, 8
    $region49: #{tpu_custom_call.1} parent=1 // pred_fallthru
      _
    // Predicated region
    $region50: #{tpu_custom_call.1} parent=1 // pred_check
      _
    $region51: #{tpu_custom_call.1} parent=1 // pred_check_branch
      %343 = sbr.rel (0) target = $region53
    $region52: #{tpu_custom_call.1} parent=1 // pred_region
      %344 = dma.done [#allocation4], 256
    $region53: #{tpu_custom_call.1} parent=1 // pred_fallthru
      _
    %345 = vsyncpa [#allocation3], 1
    %346 = vsyncpa [#allocation6], 1
    %347 = vsyncpa [#allocation9], 1
    %348 = vsyncpa [#allocation4], 1

// kernel: tpu_custom_call.1
$region0: #{tpu_custom_call.1}
  #allocation0 [shape = 'u32[]', space=smem, size = 0x4, offset = 0x4, fixed_abs, tag = 'smem constant byte address 0x4 - core index']
  #allocation1 [shape = 'u32[144,128]{1,0:T(1,128)}', space=vmem, size = 0x12000, scoped, tag = 'internal scratch']
  %s0 = inlined_call_operand.hbm [shape: bf16[16,32], index: 0, kind: input, shape index: {}]
  %s1 = inlined_call_operand.hbm [shape: bf16[16,32], index: 1, kind: input, shape index: {}]
  %s2 = inlined_call_operand.hbm [shape: bf16[32,32], index: 2, kind: input, shape index: {}]
  %s3 = inlined_call_operand.hbm [shape: bf16[32,32], index: 3, kind: input, shape index: {}]
  %s4 = inlined_call_operand.vmem [shape: f32[1,32], index: 4, kind: input, shape index: {}]
  %s5 = inlined_call_operand.vmem [shape: bf16[32,128], index: 5, kind: input, shape index: {}]
  %s6 = inlined_call_operand.vmem [shape: f32[1,128], index: 6, kind: input, shape index: {}]
  %s7 = inlined_call_operand.hbm [shape: f32[16,128], index: 7, kind: output, shape index: {}]
  %s8 = sld [smem:[#allocation0]]
  $region54: #{tpu_custom_call.1} parent=0
    _
  %s10 = ssub.s32 1, %s8
  %s11 = scalar_select 0, %s10, %s8
  $region1: #{tpu_custom_call.1} parent=0
    #allocation2 [shape = 'u8[4096]{0}', space=vmem, size = 0x1000, scoped, tag = 'input window, operand 0, single buffered']
    #allocation3 [shape = 's32[1]{0}', space=sflag, size = 0x4, scoped, tag = 'scoped memory for tpu_custom_call.1']
    #allocation4 [shape = 's32[1]{0}', space=sflag, size = 0x4, scoped, tag = 'scoped memory for tpu_custom_call.1']
    #allocation5 [shape = 'u8[4096]{0}', space=vmem, size = 0x1000, scoped, tag = 'input window, operand 1, single buffered']
    #allocation6 [shape = 's32[1]{0}', space=sflag, size = 0x4, scoped, tag = 'scoped memory for tpu_custom_call.1']
    #allocation7 [shape = 'u8[8192]{0}', space=vmem, size = 0x2000, scoped, tag = 'input window, operand 2, single buffered']
    #allocation8 [shape = 'u8[8192]{0}', space=vmem, size = 0x2000, scoped, tag = 'input window, operand 3, single buffered']
    #allocation9 [shape = 's32[1]{0}', space=sflag, size = 0x4, scoped, tag = 'scoped memory for tpu_custom_call.1']
    #allocation10 [shape = 'u8[8192]{0}', space=vmem, size = 0x2000, scoped, tag = 'output window, operand 0, single buffered']
    %12 = vsyncpa [#allocation3], 0
    %13 = vsyncpa [#allocation6], 0
    %14 = vsyncpa [#allocation9], 0
    %15 = vsyncpa [#allocation4], 0
    // Predicated region
    $region2: #{tpu_custom_call.1} parent=1 // pred_check
      _
    $region3: #{tpu_custom_call.1} parent=1 // pred_check_branch
      %17 = sbr.rel (0) target = $region5
    $region4: #{tpu_custom_call.1} parent=1 // pred_region
      %s19 = ssub.s32 128, 128
      %20 = vsyncadd [#allocation3], %s19
      %s21 = sshll.u32 [#allocation2], 4
      %s22 = int_to_ptr.vmem [resolvable:$true] %s21
      %27 = dma.hbm_to_vmem [thread:$0]  %s0, 128, %s22, [#allocation3], 64, 64, 4
    $region5: #{tpu_custom_call.1} parent=1 // pred_fallthru
      _
    // Predicated region
    $region6: #{tpu_custom_call.1} parent=1 // pred_check
      _
    $region7: #{tpu_custom_call.1} parent=1 // pred_check_branch
      %29 = sbr.rel (0) target = $region9
    $region8: #{tpu_custom_call.1} parent=1 // pred_region
      %s31 = ssub.s32 128, 128
      %32 = vsyncadd [#allocation6], %s31
      %s33 = sshll.u32 [#allocation5], 4
      %s34 = int_to_ptr.vmem [resolvable:$true] %s33
      %39 = dma.hbm_to_vmem [thread:$0]  %s1, 128, %s34, [#allocation6], 64, 64, 4
    $region9: #{tpu_custom_call.1} parent=1 // pred_fallthru
      _
    // Predicated region
    $region10: #{tpu_custom_call.1} parent=1 // pred_check
      _
    $region11: #{tpu_custom_call.1} parent=1 // pred_check_branch
      %41 = sbr.rel (0) target = $region13
    $region12: #{tpu_custom_call.1} parent=1 // pred_region
      %s43 = ssub.s32 256, 256
      %44 = vsyncadd [#allocation6], %s43
      %s45 = sshll.u32 [#allocation7], 4
      %s46 = int_to_ptr.vmem [resolvable:$true] %s45
      %51 = dma.hbm_to_vmem [thread:$0]  %s2, 256, %s46, [#allocation6], 64, 64, 4
    $region13: #{tpu_custom_call.1} parent=1 // pred_fallthru
      _
    // Predicated region
    $region14: #{tpu_custom_call.1} parent=1 // pred_check
      _
    $region15: #{tpu_custom_call.1} parent=1 // pred_check_branch
      %53 = sbr.rel (0) target = $region17
    $region16: #{tpu_custom_call.1} parent=1 // pred_region
      %s55 = ssub.s32 256, 256
      %56 = vsyncadd [#allocation9], %s55
      %s57 = sshll.u32 [#allocation8], 4
      %s58 = int_to_ptr.vmem [resolvable:$true] %s57
      %63 = dma.hbm_to_vmem [thread:$0]  %s3, 256, %s58, [#allocation9], 64, 64, 4
    $region17: #{tpu_custom_call.1} parent=1 // pred_fallthru
      _
    // Predicated region
    $region18: #{tpu_custom_call.1} parent=1 // pred_check
      _
    $region19: #{tpu_custom_call.1} parent=1 // pred_check_branch
      %65 = sbr.rel (0) target = $region21
    $region20: #{tpu_custom_call.1} parent=1 // pred_region
      _
    $region21: #{tpu_custom_call.1} parent=1 // pred_fallthru
      _
    // Predicated region
    $region22: #{tpu_custom_call.1} parent=1 // pred_check
      _
    $region23: #{tpu_custom_call.1} parent=1 // pred_check_branch
      %67 = sbr.rel (0) target = $region25
    $region24: #{tpu_custom_call.1} parent=1 // pred_region
      _
    $region25: #{tpu_custom_call.1} parent=1 // pred_fallthru
      _
    // Predicated region
    $region26: #{tpu_custom_call.1} parent=1 // pred_check
      _
    $region27: #{tpu_custom_call.1} parent=1 // pred_check_branch
      %69 = sbr.rel (0) target = $region29
    $region28: #{tpu_custom_call.1} parent=1 // pred_region
      _
    $region29: #{tpu_custom_call.1} parent=1 // pred_fallthru
      _
    // Predicated region
    $region30: #{tpu_custom_call.1} parent=1 // pred_check
      _
    $region31: #{tpu_custom_call.1} parent=1 // pred_check_branch
      %71 = sbr.rel (0) target = $region33
    $region32: #{tpu_custom_call.1} parent=1 // pred_region
      %72 = dma.done [#allocation3], 128
    $region33: #{tpu_custom_call.1} parent=1 // pred_fallthru
      _
    // Predicated region
    $region34: #{tpu_custom_call.1} parent=1 // pred_check
      _
    $region35: #{tpu_custom_call.1} parent=1 // pred_check_branch
      %74 = sbr.rel (0) target = $region37
    $region36: #{tpu_custom_call.1} parent=1 // pred_region
      %75 = dma.done [#allocation6], 128
    $region37: #{tpu_custom_call.1} parent=1 // pred_fallthru
      _
    // Predicated region
    $region38: #{tpu_custom_call.1} parent=1 // pred_check
      _
    $region39: #{tpu_custom_call.1} parent=1 // pred_check_branch
      %77 = sbr.rel (0) target = $region41
    $region40: #{tpu_custom_call.1} parent=1 // pred_region
      %78 = dma.done [#allocation6], 256
    $region41: #{tpu_custom_call.1} parent=1 // pred_fallthru
      _
    // Predicated region
    $region42: #{tpu_custom_call.1} parent=1 // pred_check
      _
    $region43: #{tpu_custom_call.1} parent=1 // pred_check_branch
      %80 = sbr.rel (0) target = $region45
    $region44: #{tpu_custom_call.1} parent=1 // pred_region
      %81 = dma.done [#allocation9], 256
    $region45: #{tpu_custom_call.1} parent=1 // pred_fallthru
      _
    %v83 = vld [vmem:[#allocation2] sm:$0xf]
    %v84 = vld [vmem:[#allocation2 + $0x4] sm:$0xf]
    %v85 = vld [vmem:[#allocation5] sm:$0xf]
    %v86 = vld [vmem:[#allocation5 + $0x4] sm:$0xf]
    %v87 = vld [vmem:[#allocation7] sm:$0xf]
    %v88 = vld [vmem:[#allocation7 + $0x4] sm:$0xf]
    %v89 = vld [vmem:[#allocation7 + $0x8] sm:$0xf]
    %v90 = vld [vmem:[#allocation7 + $0xc] sm:$0xf]
    %v91 = vld [vmem:[#allocation8] sm:$0xf]
    %v92 = vld [vmem:[#allocation8 + $0x4] sm:$0xf]
    %v93 = vld [vmem:[#allocation8 + $0x8] sm:$0xf]
    %v94 = vld [vmem:[#allocation8 + $0xc] sm:$0xf]
    %v97 = vunpack.c.l.b16 %v85
    %v98 = vunpack.c.l.b16 %v86
    %v99 = vpack.c.b16 %v98, %v97
    %v104 = vunpack.c.l.b16 %v91
    %v105 = vunpack.c.l.b16 %v92
    %v106 = vunpack.c.l.b16 %v93
    %v107 = vunpack.c.l.b16 %v94
    %v108 = vpack.c.b16 %v105, %v104
    %v109 = vpack.c.b16 %v107, %v106
    %vm112 = vcmask 261120
    %v114 = vsel %vm112, %v99, 0
    %116 = vmatprep.subr.bf16.mxu0 0
    %117 = vmatpush1.bf16.msra.mxu0 %v108
    %118 = vmatprep.subr.bf16.mxu0 0
    %119 = vmatpush1.bf16.msra.mxu0 %v109
    %120 = vmatprep.subr.bf16.mxu0 0
    %121 = vmatpush1.bf16.msra.mxu0 0
    %122 = vmatprep.subr.bf16.mxu0 0
    %123 = vmatpush1.bf16.msra.mxu0 0
    %124 = vmatprep.subr.bf16.mxu0 0
    %125 = vmatpush1.bf16.msra.mxu0 0
    %126 = vmatprep.subr.bf16.mxu0 0
    %127 = vmatpush1.bf16.msra.mxu0 0
    %128 = vmatprep.subr.bf16.mxu0 0
    %129 = vmatpush1.bf16.msra.mxu0 0
    %130 = vmatprep.subr.bf16.mxu0 0
    %131 = vmatpush1.bf16.msra.mxu0 0
    %132 = vmatprep.subr.bf16.mxu0 0
    %133 = vmatpush1.bf16.msra.mxu0 0
    %134 = vmatprep.subr.bf16.mxu0 0
    %135 = vmatpush1.bf16.msra.mxu0 0
    %136 = vmatprep.subr.bf16.mxu0 0
    %137 = vmatpush1.bf16.msra.mxu0 0
    %138 = vmatprep.subr.bf16.mxu0 0
    %139 = vmatpush1.bf16.msra.mxu0 0
    %140 = vmatprep.subr.bf16.mxu0 0
    %141 = vmatpush1.bf16.msra.mxu0 0
    %142 = vmatprep.subr.bf16.mxu0 0
    %143 = vmatpush1.bf16.msra.mxu0 0
    %144 = vmatprep.subr.bf16.mxu0 0
    %145 = vmatpush1.bf16.msra.mxu0 0
    %146 = vmatprep.subr.bf16.mxu0 0
    %147 = vmatpush1.bf16.msra.mxu0 0
    %148 = vmatprep.mubr.bf16.mxu0 0
    %149 = vmatmul.mubr.bf16.gmra.mrb[0].mxu0 %v114
    %v150 = vpop.f32.mrb[0].mxu0
    %v151 = vadd.f32 0.0, %v150
    %v152 = vpop.f32.mrb[0].mxu0
    %v153 = vpop.f32.mrb[0].mxu0
    %v154 = vadd.f32 0.0, %v153
    %v155 = vpop.f32.mrb[0].mxu0
    %156 = vdwg.mxu0
    %v159 = vunpack.c.l.b16 %v83
    %v160 = vunpack.c.l.b16 %v84
    %v161 = vpack.c.b16 %v160, %v159
    %v166 = vunpack.c.l.b16 %v87
    %v167 = vunpack.c.l.b16 %v88
    %v168 = vunpack.c.l.b16 %v89
    %v169 = vunpack.c.l.b16 %v90
    %v170 = vpack.c.b16 %v167, %v166
    %v171 = vpack.c.b16 %v169, %v168
    %v175 = vsel %vm112, %v161, 0
    %177 = vmatprep.subr.bf16.mxu0 0
    %178 = vmatpush1.bf16.msra.mxu0 %v170
    %179 = vmatprep.subr.bf16.mxu0 0
    %180 = vmatpush1.bf16.msra.mxu0 %v171
    %181 = vmatprep.subr.bf16.mxu0 0
    %182 = vmatpush1.bf16.msra.mxu0 0
    %183 = vmatprep.subr.bf16.mxu0 0
    %184 = vmatpush1.bf16.msra.mxu0 0
    %185 = vmatprep.subr.bf16.mxu0 0
    %186 = vmatpush1.bf16.msra.mxu0 0
    %187 = vmatprep.subr.bf16.mxu0 0
    %188 = vmatpush1.bf16.msra.mxu0 0
    %189 = vmatprep.subr.bf16.mxu0 0
    %190 = vmatpush1.bf16.msra.mxu0 0
    %191 = vmatprep.subr.bf16.mxu0 0
    %192 = vmatpush1.bf16.msra.mxu0 0
    %193 = vmatprep.subr.bf16.mxu0 0
    %194 = vmatpush1.bf16.msra.mxu0 0
    %195 = vmatprep.subr.bf16.mxu0 0
    %196 = vmatpush1.bf16.msra.mxu0 0
    %197 = vmatprep.subr.bf16.mxu0 0
    %198 = vmatpush1.bf16.msra.mxu0 0
    %199 = vmatprep.subr.bf16.mxu0 0
    %200 = vmatpush1.bf16.msra.mxu0 0
    %201 = vmatprep.subr.bf16.mxu0 0
    %202 = vmatpush1.bf16.msra.mxu0 0
    %203 = vmatprep.subr.bf16.mxu0 0
    %204 = vmatpush1.bf16.msra.mxu0 0
    %205 = vmatprep.subr.bf16.mxu0 0
    %206 = vmatpush1.bf16.msra.mxu0 0
    %207 = vmatprep.subr.bf16.mxu0 0
    %208 = vmatpush1.bf16.msra.mxu0 0
    %209 = vmatprep.mubr.bf16.mxu0 0
    %210 = vmatmul.mubr.bf16.gmra.mrb[0].mxu0 %v175
    %v211 = vpop.f32.mrb[0].mxu0
    %v212 = vadd.f32 %v151, %v211
    %v213 = vpop.f32.mrb[0].mxu0
    %v214 = vpop.f32.mrb[0].mxu0
    %v215 = vadd.f32 %v154, %v214
    %v216 = vpop.f32.mrb[0].mxu0
    %217 = vdwg.mxu0
    %v218 = vld [vmem:[%s4] sm:$0x1]
    %v220 = vlaneseq
    %v221 = vshrl.u32 %v220, 7
    %v222 = vsub.s32 0, %v221
    %v223 = vrot.slane %v218, %v222
    %v225 = vadd.f32 %v212, %v223
    %v226 = vadd.f32 %v215, %v223
    %v227 = vsub.f32 0.0, %v225
    %v228 = vsub.f32 0.0, %v226
    %v229 = vmul.f32 %v227, 1.442695
    %v230 = vpow.pop %v229
    %v231 = vmul.f32 %v228, 1.442695
    %v232 = vpow.pop %v231
    %v233 = vadd.f32 %v230, 1.0
    %v234 = vadd.f32 %v232, 1.0
    %v235 = vrcp.pop %v233
    %v236 = vrcp.pop %v234
    %v237 = vpack.c.bf16 %v236, %v235
    %v238 = vsub.bf16 %v85, %v83
    %v239 = vsub.bf16 %v86, %v84
    %v242 = vunpack.c.l.b16 %v238
    %v243 = vunpack.c.l.b16 %v239
    %v244 = vpack.c.b16 %v243, %v242
    %v246 = vmul.bf16 %v237, %v244
    %v248 = vunpack.c.l.b16 %v246
    %v249 = vunpack.c.h.b16 %v246
    %v250 = vpack.c.b16 %v248, %v248
    %v251 = vpack.c.b16 %v249, %v249
    %v254 = vadd.bf16 %v83, %v250
    %v255 = vadd.bf16 %v84, %v251
    %v256 = vld [vmem:[%s5] sm:$0xf]
    %v257 = vld [vmem:[%s5 + $0x4] sm:$0xf]
    %v258 = vld [vmem:[%s5 + $0x8] sm:$0xf]
    %v259 = vld [vmem:[%s5 + $0xc] sm:$0xf]
    %v260 = vld [vmem:[%s6] sm:$0x1]
    %v262 = vlaneseq
    %v263 = vshrl.u32 %v262, 7
    %v264 = vsub.s32 0, %v263
    %v265 = vrot.slane %v260, %v264
    %v269 = vunpack.c.l.b16 %v254
    %v270 = vunpack.c.l.b16 %v255
    %v271 = vpack.c.b16 %v270, %v269
    %v276 = vunpack.c.l.b16 %v256
    %v277 = vunpack.c.l.b16 %v257
    %v278 = vunpack.c.l.b16 %v258
    %v279 = vunpack.c.l.b16 %v259
    %v280 = vpack.c.b16 %v277, %v276
    %v281 = vpack.c.b16 %v279, %v278
    %v285 = vsel %vm112, %v271, 0
    %287 = vmatprep.subr.bf16.mxu0 0
    %288 = vmatpush1.bf16.msra.mxu0 %v280
    %289 = vmatprep.subr.bf16.mxu0 0
    %290 = vmatpush1.bf16.msra.mxu0 %v281
    %291 = vmatprep.subr.bf16.mxu0 0
    %292 = vmatpush1.bf16.msra.mxu0 0
    %293 = vmatprep.subr.bf16.mxu0 0
    %294 = vmatpush1.bf16.msra.mxu0 0
    %295 = vmatprep.subr.bf16.mxu0 0
    %296 = vmatpush1.bf16.msra.mxu0 0
    %297 = vmatprep.subr.bf16.mxu0 0
    %298 = vmatpush1.bf16.msra.mxu0 0
    %299 = vmatprep.subr.bf16.mxu0 0
    %300 = vmatpush1.bf16.msra.mxu0 0
    %301 = vmatprep.subr.bf16.mxu0 0
    %302 = vmatpush1.bf16.msra.mxu0 0
    %303 = vmatprep.subr.bf16.mxu0 0
    %304 = vmatpush1.bf16.msra.mxu0 0
    %305 = vmatprep.subr.bf16.mxu0 0
    %306 = vmatpush1.bf16.msra.mxu0 0
    %307 = vmatprep.subr.bf16.mxu0 0
    %308 = vmatpush1.bf16.msra.mxu0 0
    %309 = vmatprep.subr.bf16.mxu0 0
    %310 = vmatpush1.bf16.msra.mxu0 0
    %311 = vmatprep.subr.bf16.mxu0 0
    %312 = vmatpush1.bf16.msra.mxu0 0
    %313 = vmatprep.subr.bf16.mxu0 0
    %314 = vmatpush1.bf16.msra.mxu0 0
    %315 = vmatprep.subr.bf16.mxu0 0
    %316 = vmatpush1.bf16.msra.mxu0 0
    %317 = vmatprep.subr.bf16.mxu0 0
    %318 = vmatpush1.bf16.msra.mxu0 0
    %319 = vmatprep.mubr.bf16.mxu0 0
    %320 = vmatmul.mubr.bf16.gmra.mrb[0].mxu0 %v285
    %v321 = vpop.f32.mrb[0].mxu0
    %v322 = vadd.f32 %v265, %v321
    %v323 = vpop.f32.mrb[0].mxu0
    %v324 = vpop.f32.mrb[0].mxu0
    %v325 = vadd.f32 %v265, %v324
    %v326 = vpop.f32.mrb[0].mxu0
    %327 = vdwg.mxu0
    %328 = vst [vmem:[#allocation10] sm:$0xff] %v322
    %329 = vst [vmem:[#allocation10 + $0x8] sm:$0xff] %v325
    // Predicated region
    $region46: #{tpu_custom_call.1} parent=1 // pred_check
      _
    $region47: #{tpu_custom_call.1} parent=1 // pred_check_branch
      %331 = sbr.rel (0) target = $region49
    $region48: #{tpu_custom_call.1} parent=1 // pred_region
      %s333 = ssub.s32 256, 256
      %334 = vsyncadd [#allocation4], %s333
      %s335 = sshll.u32 [#allocation10], 4
      %s336 = int_to_ptr.vmem [resolvable:$true] %s335
      %341 = dma.vmem_to_hbm [thread:$0]  %s336, 256, %s7, [#allocation4], 128, 128, 8
    $region49: #{tpu_custom_call.1} parent=1 // pred_fallthru
      _
    // Predicated region
    $region50: #{tpu_custom_call.1} parent=1 // pred_check
      _
    $region51: #{tpu_custom_call.1} parent=1 // pred_check_branch
      %343 = sbr.rel (0) target = $region53
    $region52: #{tpu_custom_call.1} parent=1 // pred_region
      %344 = dma.done [#allocation4], 256
    $region53: #{tpu_custom_call.1} parent=1 // pred_fallthru
      _
    %345 = vsyncpa [#allocation3], 1
    %346 = vsyncpa [#allocation6], 1
    %347 = vsyncpa [#allocation9], 1
    %348 = vsyncpa [#allocation4], 1

</llo_original>
